<compile_context>
chip_gen: v6e
topology: v6e:2x2x1
jax: 0.10.0
libtpu: 0.0.40
codegen_flags: <defaults>
</compile_context>

<pallas_src>
import jax
import jax.numpy as jnp
from jax.experimental import pallas as pl
from jax.experimental.pallas import tpu as pltpu


def _round_up(a: int, b: int) -> int:
    return ((a + b - 1) // b) * b


def _h_swish_kernel(x_ref, o_ref):
    x = x_ref[...].astype(jnp.float32)
    # h_sigmoid(x) = relu6(x + 3) / 6 ; h_swish(x) = x * h_sigmoid(x)
    hs = jnp.clip(x + 3.0, 0.0, 6.0) * (1.0 / 6.0)
    o_ref[...] = (x * hs).astype(o_ref.dtype)


def _h_swish_jax(x: jax.Array) -> jax.Array:
    xf = x.astype(jnp.float32)
    return (xf * (jnp.clip(xf + 3.0, 0.0, 6.0) * (1.0 / 6.0))).astype(x.dtype)


def _vmem_capacity_bytes() -> int:
    try:
        return int(pltpu.get_tpu_info().vmem_capacity_bytes)
    except Exception:
        return 64 * 1024 * 1024  # conservative: v7x per-TC VMEM


def _pick_block_bytes() -> int:
    # ~8 MiB blocks on v7x (64 MiB VMEM, 3.2 TB/s HBM), ~16 MiB on v5e/v6e
    # (128 MiB VMEM) -- keeps 4x (in+out double buffered) well under VMEM.
    if _vmem_capacity_bytes() >= 100 * 1024 * 1024:
        return 16 * 1024 * 1024
    return 8 * 1024 * 1024


def _pick_lane(n: int, sub: int):
    """Widest lane width in {1024,512,256,128} dividing n; prefer one whose
    row count is a multiple of the sublane granularity (full, unmasked blocks).
    Returns None if n is not a multiple of 128 (ragged)."""
    best = None
    for cand in (1024, 512, 256, 128):
        if n % cand:
            continue
        if best is None:
            best = cand
        if (n // cand) % sub == 0:
            return cand
    return best


def _h_swish_pallas(x: jax.Array, *, block_bytes=None) -> jax.Array:
    orig_shape = x.shape
    dtype = x.dtype
    itemsize = jnp.dtype(dtype).itemsize
    n = x.size

    # Sublane granularity: 8 rows for 32-bit, 16 for 16-bit, 32 for 8-bit.
    sub = 8 * max(1, 4 // itemsize)

    lane = _pick_lane(n, sub)
    if lane is None:
        # Ragged size (n % 128 != 0): pad + slice would cost ~3 full HBM
        # passes for this bandwidth-bound op; one fused JAX pass is faster.
        return _h_swish_jax(x)

    x2d = x.reshape(-1, lane)  # contiguous -> zero-copy view
    rows = x2d.shape[0]

    if block_bytes is None:
        block_bytes = _pick_block_bytes()

    # Block sizing in bytes so f32 and bf16 see the same per-GB step count.
    tile_rows = max(sub, block_bytes // (lane * itemsize))
    tile_rows = min(tile_rows, _round_up(rows, sub))
    # Keep >= 2 grid steps when there is enough work (both v7x TCs busy).
    if rows >= 2 * sub:
        tile_rows = min(tile_rows, _round_up(pl.cdiv(rows, 2), sub))
    tile_rows = _round_up(tile_rows, sub)

    n_steps = pl.cdiv(rows, tile_rows)
    # Megacore balance: avoid a small odd step count (2-vs-1 split on v7x).
    if 1 < n_steps < 8 and n_steps % 2 == 1:
        tile_rows = _round_up(pl.cdiv(rows, n_steps + 1), sub)
        n_steps = pl.cdiv(rows, tile_rows)

    block_actual = tile_rows * lane * itemsize
    # in + out, double buffered, plus slack; cap below smallest VMEM (v7x 64M).
    vmem_limit = int(min(4 * block_actual + 8 * 1024 * 1024, 48 * 1024 * 1024))

    out2d = pl.pallas_call(
        _h_swish_kernel,
        out_shape=jax.ShapeDtypeStruct((rows, lane), dtype),
        grid=(n_steps,),
        in_specs=[pl.BlockSpec((tile_rows, lane), lambda i: (i, 0))],
        out_specs=pl.BlockSpec((tile_rows, lane), lambda i: (i, 0)),
        compiler_params=pltpu.CompilerParams(
            dimension_semantics=("parallel",),
            vmem_limit_bytes=vmem_limit,
        ),
    )(x2d)

    return out2d.reshape(orig_shape)


def h_swish(x: jax.Array, *, block_bytes=None,
            min_pallas_bytes: int = 1 << 20, force_pallas: bool = False) -> jax.Array:
    """Elementwise h_swish matching the PyTorch module semantics."""
    if not force_pallas and x.size * jnp.dtype(x.dtype).itemsize < min_pallas_bytes:
        # Tiny tensors: XLA fusion beats kernel-launch overhead.
        return _h_swish_jax(x)
    return _h_swish_pallas(x, block_bytes=block_bytes)


def _h_swish_ref(x):
    return x * (jnp.clip(x + 3.0, 0.0, 6.0) / 6.0)


if __name__ == "__main__":
    key = jax.random.PRNGKey(0)
    k1, k2, k3, k4 = jax.random.split(key, 4)

    # 1) Module-sized NCHW input (2,4,16,16) -- force the Pallas path so the
    #    kernel runs (lane=256 picked so the single block is full/unmasked).
    x1 = jax.random.normal(k1, (2, 4, 16, 16), dtype=jnp.float32) * 4.0
    o1 = jax.block_until_ready(h_swish(x1, force_pallas=True))
    assert o1.shape == x1.shape and o1.dtype == x1.dtype
    assert jnp.allclose(o1, _h_swish_ref(x1), atol=1e-6, rtol=1e-6)

    # 2) Size not a multiple of 128 -> ragged fallback (single fused JAX pass).
    x2 = jax.random.normal(k2, (2, 3, 5, 7), dtype=jnp.float32) * 4.0
    o2 = jax.block_until_ready(h_swish(x2, force_pallas=True))
    assert o2.shape == x2.shape
    assert jnp.allclose(o2, _h_swish_ref(x2), atol=1e-6, rtol=1e-6)

    # 3) Larger f32 slab -> multi-step (even) grid, both v7x TCs busy.
    x3 = jax.random.normal(k3, (4, 32, 64, 64), dtype=jnp.float32) * 4.0
    o3 = jax.block_until_ready(h_swish(x3))
    assert jnp.allclose(o3, _h_swish_ref(x3), atol=1e-6, rtol=1e-6)

    # 4) bf16 end-to-end (halves HBM traffic for this bandwidth-bound op);
    #    byte-sized blocks keep the per-GB step count the same as f32.
    x4 = (jax.random.normal(k4, (4, 32, 64, 64), dtype=jnp.float32) * 4.0
          ).astype(jnp.bfloat16)
    o4 = jax.block_until_ready(h_swish(x4))
    assert o4.dtype == jnp.bfloat16
    assert jnp.allclose(o4.astype(jnp.float32),
                        _h_swish_ref(x4.astype(jnp.float32)),
                        atol=3e-2, rtol=3e-2)

    print("KERNEL_OK")
</pallas_src>

<mosaic_0001>
module attributes {stable_mosaic.version = 11 : i64} {
  func.func @_h_swish_kernel(%arg0: i32, %arg1: memref<8x256xf32, #tpu.memory_space<vmem>>, %arg2: memref<8x256xf32, #tpu.memory_space<vmem>>) attributes {dimension_semantics = [#tpu.dimension_semantics<parallel>], iteration_bounds = array<i64: 1>, scalar_prefetch = 0 : i64, scratch_operands = 0 : i64, tpu.core_type = #tpu.core_type<tc>, window_params = [{transform_indices = @transform_0, window_bounds = array<i64: 8, 256>}, {transform_indices = @transform_1, window_bounds = array<i64: 8, 256>}]} {
    %c0 = arith.constant 0 : index
    %c0_0 = arith.constant 0 : index
    %0 = vector.load %arg1[%c0, %c0_0] : memref<8x256xf32, #tpu.memory_space<vmem>>, vector<8x256xf32>
    %cst = arith.constant 3.000000e+00 : f32
    %1 = vector.broadcast %cst : f32 to vector<8x256xf32>
    %2 = arith.addf %0, %1 : vector<8x256xf32>
    %cst_1 = arith.constant 0.000000e+00 : f32
    %cst_2 = arith.constant 6.000000e+00 : f32
    %3 = vector.broadcast %cst_1 : f32 to vector<8x256xf32>
    %4 = arith.maximumf %3, %2 : vector<8x256xf32>
    %5 = vector.broadcast %cst_2 : f32 to vector<8x256xf32>
    %6 = arith.minimumf %5, %4 : vector<8x256xf32>
    %cst_3 = arith.constant 0.166666672 : f32
    %7 = vector.broadcast %cst_3 : f32 to vector<8x256xf32>
    %8 = arith.mulf %6, %7 : vector<8x256xf32>
    %9 = arith.mulf %0, %8 : vector<8x256xf32>
    %c0_4 = arith.constant 0 : index
    %c0_5 = arith.constant 0 : index
    %10 = vector.load %arg2[%c0_4, %c0_5] : memref<8x256xf32, #tpu.memory_space<vmem>>, vector<8x256xf32>
    tpu.vector_store %arg2[%c0_4, %c0_5], %9 {strides = array<i32>} : memref<8x256xf32, #tpu.memory_space<vmem>>, vector<8x256xf32>,
    return
  }
  func.func @transform_0(%arg0: i32) -> (i32, i32) {
    %c0_i32 = arith.constant 0 : i32
    %c0_i32_0 = arith.constant 0 : i32
    return %arg0, %c0_i32 : i32, i32
  }
  func.func @transform_1(%arg0: i32) -> (i32, i32) {
    %c0_i32 = arith.constant 0 : i32
    %c0_i32_0 = arith.constant 0 : i32
    return %arg0, %c0_i32 : i32, i32
  }
}

</mosaic_0001>

<llo_original>
// kernel: tpu_custom_call.1
$region0: #{tpu_custom_call.1}
  #allocation0 [shape = 'u32[]', space=smem, size = 0x4, offset = 0x4, fixed_abs, tag = 'smem constant byte address 0x4 - core index']
  #allocation1 [shape = 'u32[144,128]{1,0:T(1,128)}', space=vmem, size = 0x12000, scoped, tag = 'internal scratch']
  %s0 = inlined_call_operand.hbm [shape: f32[8,256], index: 0, kind: input, shape index: {}]
  %s1 = inlined_call_operand.hbm [shape: f32[8,256], index: 1, kind: output, shape index: {}]
  %s2 = sld [smem:[#allocation0]]
  $region18: #{tpu_custom_call.1} parent=0
    _
  %s4 = ssub.s32 1, %s2
  %s5 = scalar_select 0, %s4, %s2
  $region1: #{tpu_custom_call.1} parent=0
    #allocation2 [shape = 'u8[8192]{0}', space=vmem, size = 0x2000, scoped, tag = 'input window, operand 0, single buffered']
    #allocation3 [shape = 's32[1]{0}', space=sflag, size = 0x4, scoped, tag = 'scoped memory for tpu_custom_call.1']
    #allocation4 [shape = 's32[1]{0}', space=sflag, size = 0x4, scoped, tag = 'scoped memory for tpu_custom_call.1']
    #allocation5 [shape = 'u8[8192]{0}', space=vmem, size = 0x2000, scoped, tag = 'output window, operand 0, single buffered']
    %6 = vsyncpa [#allocation3], 0
    %7 = vsyncpa [#allocation4], 0
    // Predicated region
    $region2: #{tpu_custom_call.1} parent=1 // pred_check
      _
    $region3: #{tpu_custom_call.1} parent=1 // pred_check_branch
      %9 = sbr.rel (0) target = $region5
    $region4: #{tpu_custom_call.1} parent=1 // pred_region
      %s11 = ssub.s32 256, 256
      %12 = vsyncadd [#allocation3], %s11
      %s14 = sshll.u32 [#allocation2], 4
      %s15 = int_to_ptr.vmem [resolvable:$true] %s14
      %17 = dma.hbm_to_vmem [thread:$0]  %s0, 256, %s15, [#allocation3]
    $region5: #{tpu_custom_call.1} parent=1 // pred_fallthru
      _
    // Predicated region
    $region6: #{tpu_custom_call.1} parent=1 // pred_check
      _
    $region7: #{tpu_custom_call.1} parent=1 // pred_check_branch
      %19 = sbr.rel (0) target = $region9
    $region8: #{tpu_custom_call.1} parent=1 // pred_region
      %20 = dma.done [#allocation3], 256
    $region9: #{tpu_custom_call.1} parent=1 // pred_fallthru
      _
    %v21 = vld [vmem:[#allocation2] sm:$0xff]
    %v22 = vld [vmem:[#allocation2 + $0x8] sm:$0xff]
    %v23 = vadd.f32 %v21, 3.0
    %v24 = vadd.f32 %v22, 3.0
    %v25 = vmax.f32 %v23, 0.0
    %v26 = vmax.f32 %v24, 0.0
    %v27 = vmin.f32 %v25, 6.0
    %v28 = vmin.f32 %v26, 6.0
    %v29 = vmul.f32 %v27, 0.16666667
    %v30 = vmul.f32 %v28, 0.16666667
    %v31 = vmul.f32 %v21, %v29
    %v32 = vmul.f32 %v22, %v30
    %33 = vst [vmem:[#allocation5] sm:$0xff] %v31
    %34 = vst [vmem:[#allocation5 + $0x8] sm:$0xff] %v32
    // Predicated region
    $region10: #{tpu_custom_call.1} parent=1 // pred_check
      _
    $region11: #{tpu_custom_call.1} parent=1 // pred_check_branch
      %36 = sbr.rel (0) target = $region13
    $region12: #{tpu_custom_call.1} parent=1 // pred_region
      %s38 = ssub.s32 256, 256
      %39 = vsyncadd [#allocation4], %s38
      %s41 = sshll.u32 [#allocation5], 4
      %s42 = int_to_ptr.vmem [resolvable:$true] %s41
      %44 = dma.vmem_to_hbm [thread:$0]  %s42, 256, %s1, [#allocation4]
    $region13: #{tpu_custom_call.1} parent=1 // pred_fallthru
      _
    // Predicated region
    $region14: #{tpu_custom_call.1} parent=1 // pred_check
      _
    $region15: #{tpu_custom_call.1} parent=1 // pred_check_branch
      %46 = sbr.rel (0) target = $region17
    $region16: #{tpu_custom_call.1} parent=1 // pred_region
      %47 = dma.done [#allocation4], 256
    $region17: #{tpu_custom_call.1} parent=1 // pred_fallthru
      _
    %48 = vsyncpa [#allocation3], 1
    %49 = vsyncpa [#allocation4], 1

</llo_original>
